<compile_context>
chip_gen: v7x
topology: tpu7x:2x2x1
jax: 0.10.0
libtpu: 0.0.40
codegen_flags: <defaults>
</compile_context>

<pallas_src>
from functools import partial

import jax
import jax.numpy as jnp
from jax.experimental import pallas as pl

# ---------------- configuration (small test shapes) ----------------
B = 2               # batch
L = 16              # sequence length
IN_CHANNEL = 32     # in_channel   (token hidden size)
HIDDEN_CHANNEL = 64 # hidden_channel of the attention MLP
OUT_CHANNEL = 64    # out_channel  (flattened output size)
GLIMPSES = 1        # glimpses (module default)
EPS_LN = 1e-6       # TRAR custom LayerNorm eps


# ---------------- fused Pallas kernel ----------------
def attflat_kernel(x_ref, mask_ref, w1_ref, b1_ref, w2_ref, b2_ref,
                   wm_ref, bm_ref, ln_g_ref, ln_b_ref, o_ref,
                   *, batch, seq_len, glimpses):
    # x:    (B*L, C)   fp32 token features
    # mask: (B*L, 1)   fp32, 1.0 = padded token
    x = x_ref[...]
    neg = mask_ref[...] * (-1e9)

    # --- attention MLP over all tokens at once (two MXU matmuls) ---
    h = jnp.dot(x, w1_ref[...], preferred_element_type=jnp.float32) + b1_ref[...]
    h = jnp.maximum(h, 0.0)                     # ReLU (dropout p=0 -> identity)
    att = jnp.dot(h, w2_ref[...], preferred_element_type=jnp.float32) + b2_ref[...]
    att = att + neg                             # masked_fill(mask, -1e9), additive form

    # --- per-batch masked softmax over the sequence dim + glimpse-weighted pooling ---
    # batch/seq_len/glimpses are compile-time constants; static unroll keeps every
    # tensor 2-D (plain sublane reductions, no 3-D reshapes, no grid overhead).
    pooled_rows = []
    for b in range(batch):
        lo, hi = b * seq_len, (b + 1) * seq_len
        a_b = att[lo:hi, :]                                     # (L, G)
        a_b = a_b - jnp.max(a_b, axis=0, keepdims=True)
        e_b = jnp.exp(a_b)
        p_b = e_b * pl.reciprocal(jnp.sum(e_b, axis=0, keepdims=True), approx=True)
        x_b = x[lo:hi, :]                                       # (L, C)
        parts = [jnp.sum(p_b[:, g:g + 1] * x_b, axis=0, keepdims=True)   # (1, C)
                 for g in range(glimpses)]
        pooled_rows.append(parts[0] if glimpses == 1
                           else jnp.concatenate(parts, axis=1))          # (1, G*C)
    x_atted = (pooled_rows[0] if batch == 1
               else jnp.concatenate(pooled_rows, axis=0))                # (B, G*C)

    # --- linear_merge ---
    m = jnp.dot(x_atted, wm_ref[...], preferred_element_type=jnp.float32) + bm_ref[...]

    # --- TRAR custom LayerNorm: gamma*(m-mean)/(std_unbiased+eps)+beta ---
    # (unbiased std, eps added to std — matches TRAR's LayerNorm, not nn.LayerNorm)
    n = m.shape[-1]
    mean = jnp.mean(m, axis=-1, keepdims=True)
    var = jnp.sum((m - mean) ** 2, axis=-1, keepdims=True) * (1.0 / (n - 1))
    inv_std = pl.reciprocal(jnp.sqrt(var) + EPS_LN, approx=True)
    o_ref[...] = ln_g_ref[...] * (m - mean) * inv_std + ln_b_ref[...]


# ---------------- wrapper ----------------
def attflat_forward(x, x_mask, p):
    """x: (B, L, C) fp32; x_mask: (B, 1, 1, L) bool (True = padded)."""
    bsz, seq, cin = x.shape
    glimpses = p['mlp_w2'].shape[1]
    out_ch = p['merge_w'].shape[1]

    x2d = x.reshape(bsz * seq, cin)                             # free XLA reshape
    mask2d = x_mask.reshape(bsz * seq, 1).astype(jnp.float32)   # (B,1,1,L) -> (B*L,1)

    kernel = partial(attflat_kernel, batch=bsz, seq_len=seq, glimpses=glimpses)
    return pl.pallas_call(
        kernel,
        out_shape=jax.ShapeDtypeStruct((bsz, out_ch), jnp.float32),
        # no grid / BlockSpecs: the whole (KB-scale) problem is one VMEM-resident block
    )(x2d, mask2d,
      p['mlp_w1'], p['mlp_b1'].reshape(1, -1),
      p['mlp_w2'], p['mlp_b2'].reshape(1, -1),
      p['merge_w'], p['merge_b'].reshape(1, -1),
      p['ln_g'].reshape(1, -1), p['ln_b'].reshape(1, -1))


# ---------------- parameters ----------------
def init_params(key):
    def dense(k, fan_in, fan_out):
        kw, kb = jax.random.split(k)
        w = jax.random.normal(kw, (fan_in, fan_out), jnp.float32) * 0.05
        b = jax.random.normal(kb, (fan_out,), jnp.float32) * 0.05
        return w, b

    keys = jax.random.split(key, 3)
    p = {}
    # MLP: Linear(C -> H) -> ReLU -> (dropout 0) -> Linear(H -> glimpses)
    p['mlp_w1'], p['mlp_b1'] = dense(keys[0], IN_CHANNEL, HIDDEN_CHANNEL)
    p['mlp_w2'], p['mlp_b2'] = dense(keys[1], HIDDEN_CHANNEL, GLIMPSES)
    # linear_merge: Linear(C * glimpses -> out_channel)
    p['merge_w'], p['merge_b'] = dense(keys[2], IN_CHANNEL * GLIMPSES, OUT_CHANNEL)
    # TRAR LayerNorm params (gamma=1, beta=0)
    p['ln_g'] = jnp.ones((OUT_CHANNEL,), jnp.float32)
    p['ln_b'] = jnp.zeros((OUT_CHANNEL,), jnp.float32)
    return p


# ---------------- main ----------------
if __name__ == "__main__":
    key = jax.random.PRNGKey(0)
    k_p, k_x = jax.random.split(key)
    params = init_params(k_p)

    x = jax.random.normal(k_x, (B, L, IN_CHANNEL), jnp.float32)
    # padding mask (B, 1, 1, L): the last 4 tokens of every sequence are padding
    x_mask = jnp.broadcast_to(jnp.arange(L)[None, None, None, :] >= L - 4, (B, 1, 1, L))

    out = attflat_forward(x, x_mask, params)
    out = jax.block_until_ready(out)

    assert out.shape == (B, OUT_CHANNEL)
    assert bool(jnp.all(jnp.isfinite(out)))
    print("KERNEL_OK")
</pallas_src>

<mosaic_0001>
module attributes {stable_mosaic.version = 11 : i64} {
  func.func @attflat_kernel(%arg0: memref<32x32xf32, #tpu.memory_space<vmem>>, %arg1: memref<32x1xf32, #tpu.memory_space<vmem>>, %arg2: memref<32x64xf32, #tpu.memory_space<vmem>>, %arg3: memref<1x64xf32, #tpu.memory_space<vmem>>, %arg4: memref<64x1xf32, #tpu.memory_space<vmem>>, %arg5: memref<1x1xf32, #tpu.memory_space<vmem>>, %arg6: memref<32x64xf32, #tpu.memory_space<vmem>>, %arg7: memref<1x64xf32, #tpu.memory_space<vmem>>, %arg8: memref<1x64xf32, #tpu.memory_space<vmem>>, %arg9: memref<1x64xf32, #tpu.memory_space<vmem>>, %arg10: memref<2x64xf32, #tpu.memory_space<vmem>>) attributes {dimension_semantics = [], scalar_prefetch = 0 : i64, scratch_operands = 0 : i64, tpu.core_type = #tpu.core_type<tc>} {
    %c0 = arith.constant 0 : index
    %c0_0 = arith.constant 0 : index
    %0 = vector.load %arg0[%c0, %c0_0] : memref<32x32xf32, #tpu.memory_space<vmem>>, vector<32x32xf32>
    %c0_1 = arith.constant 0 : index
    %c0_2 = arith.constant 0 : index
    %1 = vector.load %arg1[%c0_1, %c0_2] : memref<32x1xf32, #tpu.memory_space<vmem>>, vector<32x1xf32>
    %cst = arith.constant -1.000000e+09 : f32
    %2 = vector.broadcast %cst : f32 to vector<32x1xf32>
    %3 = arith.mulf %1, %2 : vector<32x1xf32>
    %c0_3 = arith.constant 0 : index
    %c0_4 = arith.constant 0 : index
    %4 = vector.load %arg2[%c0_3, %c0_4] : memref<32x64xf32, #tpu.memory_space<vmem>>, vector<32x64xf32>
    %cst_5 = arith.constant dense<0.000000e+00> : vector<32x64xf32>
    %5 = tpu.matmul %0, %4, %cst_5 {dimension_numbers = #tpu.dot_dimension_numbers<[1], [0], [0], [1], [0, 0, 1, 1], [], []>} : vector<32x32xf32>, vector<32x64xf32>, vector<32x64xf32> -> vector<32x64xf32>
    %c0_6 = arith.constant 0 : index
    %c0_7 = arith.constant 0 : index
    %6 = vector.load %arg3[%c0_6, %c0_7] : memref<1x64xf32, #tpu.memory_space<vmem>>, vector<1x64xf32>
    %7 = vector.broadcast %6 : vector<1x64xf32> to vector<32x64xf32>
    %8 = arith.addf %5, %7 : vector<32x64xf32>
    %cst_8 = arith.constant 0.000000e+00 : f32
    %9 = vector.broadcast %cst_8 : f32 to vector<32x64xf32>
    %10 = arith.maximumf %8, %9 : vector<32x64xf32>
    %c0_9 = arith.constant 0 : index
    %c0_10 = arith.constant 0 : index
    %11 = vector.load %arg4[%c0_9, %c0_10] : memref<64x1xf32, #tpu.memory_space<vmem>>, vector<64x1xf32>
    %cst_11 = arith.constant dense<0.000000e+00> : vector<32x1xf32>
    %12 = tpu.matmul %10, %11, %cst_11 {dimension_numbers = #tpu.dot_dimension_numbers<[1], [0], [0], [1], [0, 0, 1, 1], [], []>} : vector<32x64xf32>, vector<64x1xf32>, vector<32x1xf32> -> vector<32x1xf32>
    %c0_12 = arith.constant 0 : index
    %c0_13 = arith.constant 0 : index
    %13 = vector.load %arg5[%c0_12, %c0_13] : memref<1x1xf32, #tpu.memory_space<vmem>>, vector<1x1xf32>
    %14 = vector.broadcast %13 : vector<1x1xf32> to vector<32x1xf32>
    %15 = arith.addf %12, %14 : vector<32x1xf32>
    %16 = arith.addf %15, %3 : vector<32x1xf32>
    %17 = vector.extract_strided_slice %16 {offsets = [0, 0], sizes = [16, 1], strides = [1, 1]} : vector<32x1xf32> to vector<16x1xf32>
    %cst_14 = arith.constant dense<0xFF800000> : vector<1xf32>
    %18 = vector.multi_reduction <maximumf>, %17, %cst_14 [0] : vector<16x1xf32> to vector<1xf32>
    %19 = vector.shape_cast %18 : vector<1xf32> to vector<1x1xf32>
    %20 = vector.broadcast %19 : vector<1x1xf32> to vector<16x1xf32>
    %21 = arith.subf %17, %20 : vector<16x1xf32>
    %22 = math.exp %21 : vector<16x1xf32>
    %cst_15 = arith.constant dense<0.000000e+00> : vector<1xf32>
    %23 = vector.multi_reduction <add>, %22, %cst_15 [0] : vector<16x1xf32> to vector<1xf32>
    %24 = vector.shape_cast %23 : vector<1xf32> to vector<1x1xf32>
    %25 = tpu.reciprocal %24 {approx = true} : vector<1x1xf32> -> vector<1x1xf32>
    %26 = vector.broadcast %25 : vector<1x1xf32> to vector<16x1xf32>
    %27 = arith.mulf %22, %26 : vector<16x1xf32>
    %28 = vector.extract_strided_slice %0 {offsets = [0, 0], sizes = [16, 32], strides = [1, 1]} : vector<32x32xf32> to vector<16x32xf32>
    %29 = vector.broadcast %27 : vector<16x1xf32> to vector<16x32xf32>
    %30 = arith.mulf %29, %28 : vector<16x32xf32>
    %cst_16 = arith.constant dense<0.000000e+00> : vector<32xf32>
    %31 = vector.multi_reduction <add>, %30, %cst_16 [0] : vector<16x32xf32> to vector<32xf32>
    %32 = vector.shape_cast %31 : vector<32xf32> to vector<1x32xf32>
    %33 = vector.extract_strided_slice %16 {offsets = [16, 0], sizes = [16, 1], strides = [1, 1]} : vector<32x1xf32> to vector<16x1xf32>
    %cst_17 = arith.constant dense<0xFF800000> : vector<1xf32>
    %34 = vector.multi_reduction <maximumf>, %33, %cst_17 [0] : vector<16x1xf32> to vector<1xf32>
    %35 = vector.shape_cast %34 : vector<1xf32> to vector<1x1xf32>
    %36 = vector.broadcast %35 : vector<1x1xf32> to vector<16x1xf32>
    %37 = arith.subf %33, %36 : vector<16x1xf32>
    %38 = math.exp %37 : vector<16x1xf32>
    %cst_18 = arith.constant dense<0.000000e+00> : vector<1xf32>
    %39 = vector.multi_reduction <add>, %38, %cst_18 [0] : vector<16x1xf32> to vector<1xf32>
    %40 = vector.shape_cast %39 : vector<1xf32> to vector<1x1xf32>
    %41 = tpu.reciprocal %40 {approx = true} : vector<1x1xf32> -> vector<1x1xf32>
    %42 = vector.broadcast %41 : vector<1x1xf32> to vector<16x1xf32>
    %43 = arith.mulf %38, %42 : vector<16x1xf32>
    %44 = vector.extract_strided_slice %0 {offsets = [16, 0], sizes = [16, 32], strides = [1, 1]} : vector<32x32xf32> to vector<16x32xf32>
    %45 = vector.broadcast %43 : vector<16x1xf32> to vector<16x32xf32>
    %46 = arith.mulf %45, %44 : vector<16x32xf32>
    %cst_19 = arith.constant dense<0.000000e+00> : vector<32xf32>
    %47 = vector.multi_reduction <add>, %46, %cst_19 [0] : vector<16x32xf32> to vector<32xf32>
    %48 = vector.shape_cast %47 : vector<32xf32> to vector<1x32xf32>
    %49 = tpu.concatenate %32, %48 in 0 : vector<1x32xf32>, vector<1x32xf32> -> vector<2x32xf32>
    %c0_20 = arith.constant 0 : index
    %c0_21 = arith.constant 0 : index
    %50 = vector.load %arg6[%c0_20, %c0_21] : memref<32x64xf32, #tpu.memory_space<vmem>>, vector<32x64xf32>
    %cst_22 = arith.constant dense<0.000000e+00> : vector<2x64xf32>
    %51 = tpu.matmul %49, %50, %cst_22 {dimension_numbers = #tpu.dot_dimension_numbers<[1], [0], [0], [1], [0, 0, 1, 1], [], []>} : vector<2x32xf32>, vector<32x64xf32>, vector<2x64xf32> -> vector<2x64xf32>
    %c0_23 = arith.constant 0 : index
    %c0_24 = arith.constant 0 : index
    %52 = vector.load %arg7[%c0_23, %c0_24] : memref<1x64xf32, #tpu.memory_space<vmem>>, vector<1x64xf32>
    %53 = vector.broadcast %52 : vector<1x64xf32> to vector<2x64xf32>
    %54 = arith.addf %51, %53 : vector<2x64xf32>
    %cst_25 = arith.constant dense<0.000000e+00> : vector<2xf32>
    %55 = vector.multi_reduction <add>, %54, %cst_25 [1] : vector<2x64xf32> to vector<2xf32>
    %56 = vector.shape_cast %55 : vector<2xf32> to vector<2x1xf32>
    %cst_26 = arith.constant 6.400000e+01 : f32
    %57 = vector.broadcast %cst_26 : f32 to vector<2x1xf32>
    %58 = arith.divf %56, %57 : vector<2x1xf32>
    %59 = vector.broadcast %58 : vector<2x1xf32> to vector<2x64xf32>
    %60 = arith.subf %54, %59 : vector<2x64xf32>
    %61 = arith.mulf %60, %60 : vector<2x64xf32>
    %cst_27 = arith.constant dense<0.000000e+00> : vector<2xf32>
    %62 = vector.multi_reduction <add>, %61, %cst_27 [1] : vector<2x64xf32> to vector<2xf32>
    %63 = vector.shape_cast %62 : vector<2xf32> to vector<2x1xf32>
    %cst_28 = arith.constant 0.0158730168 : f32
    %64 = vector.broadcast %cst_28 : f32 to vector<2x1xf32>
    %65 = arith.mulf %63, %64 : vector<2x1xf32>
    %66 = math.sqrt %65 : vector<2x1xf32>
    %cst_29 = arith.constant 9.99999997E-7 : f32
    %67 = vector.broadcast %cst_29 : f32 to vector<2x1xf32>
    %68 = arith.addf %66, %67 : vector<2x1xf32>
    %69 = tpu.reciprocal %68 {approx = true} : vector<2x1xf32> -> vector<2x1xf32>
    %c0_30 = arith.constant 0 : index
    %c0_31 = arith.constant 0 : index
    %70 = vector.load %arg8[%c0_30, %c0_31] : memref<1x64xf32, #tpu.memory_space<vmem>>, vector<1x64xf32>
    %71 = vector.broadcast %58 : vector<2x1xf32> to vector<2x64xf32>
    %72 = arith.subf %54, %71 : vector<2x64xf32>
    %73 = vector.broadcast %70 : vector<1x64xf32> to vector<2x64xf32>
    %74 = arith.mulf %73, %72 : vector<2x64xf32>
    %75 = vector.broadcast %69 : vector<2x1xf32> to vector<2x64xf32>
    %76 = arith.mulf %74, %75 : vector<2x64xf32>
    %c0_32 = arith.constant 0 : index
    %c0_33 = arith.constant 0 : index
    %77 = vector.load %arg9[%c0_32, %c0_33] : memref<1x64xf32, #tpu.memory_space<vmem>>, vector<1x64xf32>
    %78 = vector.broadcast %77 : vector<1x64xf32> to vector<2x64xf32>
    %79 = arith.addf %76, %78 : vector<2x64xf32>
    %c0_34 = arith.constant 0 : index
    %c0_35 = arith.constant 0 : index
    %80 = vector.load %arg10[%c0_34, %c0_35] : memref<2x64xf32, #tpu.memory_space<vmem>>, vector<2x64xf32>
    tpu.vector_store %arg10[%c0_34, %c0_35], %79 {strides = array<i32>} : memref<2x64xf32, #tpu.memory_space<vmem>>, vector<2x64xf32>,
    return
  }
}

</mosaic_0001>

<llo_original>
// kernel: tpu_custom_call.1
$region0: #{tpu_custom_call.1}
  #allocation0 [shape = 'u32[]', space=smem, size = 0x4, offset = 0x4, fixed_abs, tag = 'smem constant byte address 0x4 - core index']
  #allocation1 [shape = 'u32[144,128]{1,0:T(1,128)}', space=vmem, size = 0x12000, scoped, tag = 'internal scratch']
  #allocation2 [shape = 'f32[1,1]{1,0:T(1,128)S(1)}', space=vmem, size = 0x200, scoped, tag = 'scoped memory for tpu_custom_call.1']
  %s0 = inlined_call_operand.vmem [shape: f32[32,32], index: 0, kind: input, shape index: {}]
  %s1 = inlined_call_operand.vmem [shape: f32[32,1], index: 1, kind: input, shape index: {}]
  %s2 = inlined_call_operand.vmem [shape: f32[32,64], index: 2, kind: input, shape index: {}]
  %s3 = inlined_call_operand.vmem [shape: f32[1,64], index: 3, kind: input, shape index: {}]
  %s4 = inlined_call_operand.vmem [shape: f32[64,1], index: 4, kind: input, shape index: {}]
  %s5 = inlined_call_operand.<no memory space> [shape: f32[1,1], index: 5, kind: input, shape index: {}]
  %s6 = inlined_call_operand.vmem [shape: f32[32,64], index: 6, kind: input, shape index: {}]
  %s7 = inlined_call_operand.vmem [shape: f32[1,64], index: 7, kind: input, shape index: {}]
  %s8 = inlined_call_operand.vmem [shape: f32[1,64], index: 8, kind: input, shape index: {}]
  %s9 = inlined_call_operand.vmem [shape: f32[1,64], index: 9, kind: input, shape index: {}]
  %s10 = inlined_call_operand.hbm [shape: f32[2,64], index: 10, kind: output, shape index: {}]
  %s11 = sld [smem:[#allocation0]]
  $region50: #{tpu_custom_call.1} parent=0
    _
  %s13 = ssub.s32 1, %s11
  %s14 = scalar_select 0, %s13, %s11
  %v15 = vstv %s5
  %16 = vst [vmem:[#allocation2] sm:$0x1] %v15
  $region1: #{tpu_custom_call.1} parent=0
    #allocation3 [shape = 'u8[1024]{0}', space=vmem, size = 0x400, scoped, tag = 'output window, operand 0, single buffered']
    #allocation4 [shape = 's32[1]{0}', space=sflag, size = 0x4, scoped, tag = 'scoped memory for tpu_custom_call.1']
    %17 = vsyncpa [#allocation4], 0
    // Predicated region
    $region2: #{tpu_custom_call.1} parent=1 // pred_check
      _
    $region3: #{tpu_custom_call.1} parent=1 // pred_check_branch
      %19 = sbr.rel (0) target = $region5
    $region4: #{tpu_custom_call.1} parent=1 // pred_region
      _
    $region5: #{tpu_custom_call.1} parent=1 // pred_fallthru
      _
    // Predicated region
    $region6: #{tpu_custom_call.1} parent=1 // pred_check
      _
    $region7: #{tpu_custom_call.1} parent=1 // pred_check_branch
      %21 = sbr.rel (0) target = $region9
    $region8: #{tpu_custom_call.1} parent=1 // pred_region
      _
    $region9: #{tpu_custom_call.1} parent=1 // pred_fallthru
      _
    // Predicated region
    $region10: #{tpu_custom_call.1} parent=1 // pred_check
      _
    $region11: #{tpu_custom_call.1} parent=1 // pred_check_branch
      %23 = sbr.rel (0) target = $region13
    $region12: #{tpu_custom_call.1} parent=1 // pred_region
      _
    $region13: #{tpu_custom_call.1} parent=1 // pred_fallthru
      _
    // Predicated region
    $region14: #{tpu_custom_call.1} parent=1 // pred_check
      _
    $region15: #{tpu_custom_call.1} parent=1 // pred_check_branch
      %25 = sbr.rel (0) target = $region17
    $region16: #{tpu_custom_call.1} parent=1 // pred_region
      _
    $region17: #{tpu_custom_call.1} parent=1 // pred_fallthru
      _
    // Predicated region
    $region18: #{tpu_custom_call.1} parent=1 // pred_check
      _
    $region19: #{tpu_custom_call.1} parent=1 // pred_check_branch
      %27 = sbr.rel (0) target = $region21
    $region20: #{tpu_custom_call.1} parent=1 // pred_region
      _
    $region21: #{tpu_custom_call.1} parent=1 // pred_fallthru
      _
    // Predicated region
    $region22: #{tpu_custom_call.1} parent=1 // pred_check
      _
    $region23: #{tpu_custom_call.1} parent=1 // pred_check_branch
      %29 = sbr.rel (0) target = $region25
    $region24: #{tpu_custom_call.1} parent=1 // pred_region
      _
    $region25: #{tpu_custom_call.1} parent=1 // pred_fallthru
      _
    // Predicated region
    $region26: #{tpu_custom_call.1} parent=1 // pred_check
      _
    $region27: #{tpu_custom_call.1} parent=1 // pred_check_branch
      %31 = sbr.rel (0) target = $region29
    $region28: #{tpu_custom_call.1} parent=1 // pred_region
      _
    $region29: #{tpu_custom_call.1} parent=1 // pred_fallthru
      _
    // Predicated region
    $region30: #{tpu_custom_call.1} parent=1 // pred_check
      _
    $region31: #{tpu_custom_call.1} parent=1 // pred_check_branch
      %33 = sbr.rel (0) target = $region33
    $region32: #{tpu_custom_call.1} parent=1 // pred_region
      _
    $region33: #{tpu_custom_call.1} parent=1 // pred_fallthru
      _
    // Predicated region
    $region34: #{tpu_custom_call.1} parent=1 // pred_check
      _
    $region35: #{tpu_custom_call.1} parent=1 // pred_check_branch
      %35 = sbr.rel (0) target = $region37
    $region36: #{tpu_custom_call.1} parent=1 // pred_region
      _
    $region37: #{tpu_custom_call.1} parent=1 // pred_fallthru
      _
    // Predicated region
    $region38: #{tpu_custom_call.1} parent=1 // pred_check
      _
    $region39: #{tpu_custom_call.1} parent=1 // pred_check_branch
      %37 = sbr.rel (0) target = $region41
    $region40: #{tpu_custom_call.1} parent=1 // pred_region
      _
    $region41: #{tpu_custom_call.1} parent=1 // pred_fallthru
      _
    %v38 = vld [vmem:[%s0] sm:$0xff]
    %v39 = vld [vmem:[%s0 + $0x8] sm:$0xff]
    %v40 = vld [vmem:[%s0 + $0x10] sm:$0xff]
    %v41 = vld [vmem:[%s0 + $0x18] sm:$0xff]
    %v42 = vld [vmem:[%s1] sm:$0xff]
    %v43 = vld [vmem:[%s1 + $0x8] sm:$0xff]
    %v44 = vld [vmem:[%s1 + $0x10] sm:$0xff]
    %v45 = vld [vmem:[%s1 + $0x18] sm:$0xff]
    %v46 = vmul.f32 %v42, -1e+09
    %v47 = vmul.f32 %v43, -1e+09
    %v48 = vmul.f32 %v44, -1e+09
    %v49 = vmul.f32 %v45, -1e+09
    %v50 = vld [vmem:[%s2] sm:$0xff]
    %v51 = vld [vmem:[%s2 + $0x8] sm:$0xff]
    %v52 = vld [vmem:[%s2 + $0x10] sm:$0xff]
    %v53 = vld [vmem:[%s2 + $0x18] sm:$0xff]
    %v54 = vld [vmem:[%s3] sm:$0x1]
    %v56 = vlaneseq
    %v57 = vshrl.u32 %v56, 7
    %v58 = vsub.s32 0, %v57
    %v59 = vrot.slane %v54, %v58
    %vm61 = vcmask 261120
    %v63 = vsel %vm61, %v38, 0
    %v66 = vsel %vm61, %v39, 0
    %v69 = vsel %vm61, %v40, 0
    %v72 = vsel %vm61, %v41, 0
    %74 = vmatprep.subr.mxu0 0.0
    %75 = vmatpush1.msra.mxu0 %v50
    %76 = vmatprep.subr.mxu0 0.0
    %77 = vmatpush1.msra.mxu0 %v51
    %78 = vmatprep.subr.mxu0 0.0
    %79 = vmatpush1.msra.mxu0 %v52
    %80 = vmatprep.subr.mxu0 0.0
    %81 = vmatpush1.msra.mxu0 %v53
    %82 = vmatprep.subr.mxu0 0.0
    %83 = vmatpush1.msra.mxu0 0.0
    %84 = vmatprep.subr.mxu0 0.0
    %85 = vmatpush1.msra.mxu0 0.0
    %86 = vmatprep.subr.mxu0 0.0
    %87 = vmatpush1.msra.mxu0 0.0
    %88 = vmatprep.subr.mxu0 0.0
    %89 = vmatpush1.msra.mxu0 0.0
    %90 = vmatprep.subr.mxu0 0.0
    %91 = vmatpush1.msra.mxu0 0.0
    %92 = vmatprep.subr.mxu0 0.0
    %93 = vmatpush1.msra.mxu0 0.0
    %94 = vmatprep.subr.mxu0 0.0
    %95 = vmatpush1.msra.mxu0 0.0
    %96 = vmatprep.subr.mxu0 0.0
    %97 = vmatpush1.msra.mxu0 0.0
    %98 = vmatprep.subr.mxu0 0.0
    %99 = vmatpush1.msra.mxu0 0.0
    %100 = vmatprep.subr.mxu0 0.0
    %101 = vmatpush1.msra.mxu0 0.0
    %102 = vmatprep.subr.mxu0 0.0
    %103 = vmatpush1.msra.mxu0 0.0
    %104 = vmatprep.subr.mxu0 0.0
    %105 = vmatpush1.msra.mxu0 0.0
    %106 = vmatprep.subr.mxu0 0.0
    %107 = vmatpush1.msra.mxu0 0.0
    %108 = vmatprep.subr.mxu0 0.0
    %109 = vmatpush1.msra.mxu0 0.0
    %110 = vmatprep.subr.mxu0 0.0
    %111 = vmatpush1.msra.mxu0 0.0
    %112 = vmatprep.subr.mxu0 0.0
    %113 = vmatpush1.msra.mxu0 0.0
    %114 = vmatprep.subr.mxu0 0.0
    %115 = vmatpush1.msra.mxu0 0.0
    %116 = vmatprep.subr.mxu0 0.0
    %117 = vmatpush1.msra.mxu0 0.0
    %118 = vmatprep.subr.mxu0 0.0
    %119 = vmatpush1.msra.mxu0 0.0
    %120 = vmatprep.subr.mxu0 0.0
    %121 = vmatpush1.msra.mxu0 0.0
    %122 = vmatprep.subr.mxu0 0.0
    %123 = vmatpush1.msra.mxu0 0.0
    %124 = vmatprep.subr.mxu0 0.0
    %125 = vmatpush1.msra.mxu0 0.0
    %126 = vmatprep.subr.mxu0 0.0
    %127 = vmatpush1.msra.mxu0 0.0
    %128 = vmatprep.subr.mxu0 0.0
    %129 = vmatpush1.msra.mxu0 0.0
    %130 = vmatprep.subr.mxu0 0.0
    %131 = vmatpush1.msra.mxu0 0.0
    %132 = vmatprep.subr.mxu0 0.0
    %133 = vmatpush1.msra.mxu0 0.0
    %134 = vmatprep.subr.mxu0 0.0
    %135 = vmatpush1.msra.mxu0 0.0
    %136 = vmatprep.subr.mxu0 0.0
    %137 = vmatpush1.msra.mxu0 0.0
    %138 = vmatprep.mubr.f32.mxu0 0.0
    %139 = vmatmul.mubr.f32.gmra.mrb[0].mxu0 %v63
    %v140 = vpop.f32.mrb[0].mxu0
    %v141 = vadd.f32 %v59, %v140
    %v142 = vpop.f32.mrb[0].mxu0
    %143 = vmatprep.mubr.f32.mxu0 0.0
    %144 = vmatmul.mubr.f32.gmra.mrb[0].mxu0 %v66
    %v145 = vpop.f32.mrb[0].mxu0
    %v146 = vadd.f32 %v59, %v145
    %v147 = vpop.f32.mrb[0].mxu0
    %148 = vmatprep.mubr.f32.mxu0 0.0
    %149 = vmatmul.mubr.f32.gmra.mrb[0].mxu0 %v69
    %v150 = vpop.f32.mrb[0].mxu0
    %v151 = vadd.f32 %v59, %v150
    %v152 = vpop.f32.mrb[0].mxu0
    %153 = vmatprep.mubr.f32.mxu0 0.0
    %154 = vmatmul.mubr.f32.gmra.mrb[0].mxu0 %v72
    %v155 = vpop.f32.mrb[0].mxu0
    %v156 = vadd.f32 %v59, %v155
    %v157 = vpop.f32.mrb[0].mxu0
    %158 = vdwg.mxu0
    %v159 = vmax.f32 %v141, 0.0
    %v160 = vmax.f32 %v146, 0.0
    %v161 = vmax.f32 %v151, 0.0
    %v162 = vmax.f32 %v156, 0.0
    %v163 = vld [vmem:[%s4] sm:$0xff]
    %v164 = vld [vmem:[%s4 + $0x8] sm:$0xff]
    %v165 = vld [vmem:[%s4 + $0x10] sm:$0xff]
    %v166 = vld [vmem:[%s4 + $0x18] sm:$0xff]
    %v167 = vld [vmem:[%s4 + $0x20] sm:$0xff]
    %v168 = vld [vmem:[%s4 + $0x28] sm:$0xff]
    %v169 = vld [vmem:[%s4 + $0x30] sm:$0xff]
    %v170 = vld [vmem:[%s4 + $0x38] sm:$0xff]
    %v171 = vld [vmem:[#allocation2] sm:$0x1]
    %v173 = vlaneseq
    %v174 = vshrl.u32 %v173, 7
    %v175 = vsub.s32 0, %v174
    %v176 = vrot.slane %v171, %v175
    %vm178 = vcmask 523264
    %v180 = vsel %vm178, %v159, 0
    %v183 = vsel %vm178, %v160, 0
    %v186 = vsel %vm178, %v161, 0
    %v189 = vsel %vm178, %v162, 0
    %191 = vmatprep.subr.mxu0 0.0
    %192 = vmatpush1.msra.mxu0 %v163
    %193 = vmatprep.subr.mxu0 0.0
    %194 = vmatpush1.msra.mxu0 %v164
    %195 = vmatprep.subr.mxu0 0.0
    %196 = vmatpush1.msra.mxu0 %v165
    %197 = vmatprep.subr.mxu0 0.0
    %198 = vmatpush1.msra.mxu0 %v166
    %199 = vmatprep.subr.mxu0 0.0
    %200 = vmatpush1.msra.mxu0 %v167
    %201 = vmatprep.subr.mxu0 0.0
    %202 = vmatpush1.msra.mxu0 %v168
    %203 = vmatprep.subr.mxu0 0.0
    %204 = vmatpush1.msra.mxu0 %v169
    %205 = vmatprep.subr.mxu0 0.0
    %206 = vmatpush1.msra.mxu0 %v170
    %207 = vmatprep.subr.mxu0 0.0
    %208 = vmatpush1.msra.mxu0 0.0
    %209 = vmatprep.subr.mxu0 0.0
    %210 = vmatpush1.msra.mxu0 0.0
    %211 = vmatprep.subr.mxu0 0.0
    %212 = vmatpush1.msra.mxu0 0.0
    %213 = vmatprep.subr.mxu0 0.0
    %214 = vmatpush1.msra.mxu0 0.0
    %215 = vmatprep.subr.mxu0 0.0
    %216 = vmatpush1.msra.mxu0 0.0
    %217 = vmatprep.subr.mxu0 0.0
    %218 = vmatpush1.msra.mxu0 0.0
    %219 = vmatprep.subr.mxu0 0.0
    %220 = vmatpush1.msra.mxu0 0.0
    %221 = vmatprep.subr.mxu0 0.0
    %222 = vmatpush1.msra.mxu0 0.0
    %223 = vmatprep.subr.mxu0 0.0
    %224 = vmatpush1.msra.mxu0 0.0
    %225 = vmatprep.subr.mxu0 0.0
    %226 = vmatpush1.msra.mxu0 0.0
    %227 = vmatprep.subr.mxu0 0.0
    %228 = vmatpush1.msra.mxu0 0.0
    %229 = vmatprep.subr.mxu0 0.0
    %230 = vmatpush1.msra.mxu0 0.0
    %231 = vmatprep.subr.mxu0 0.0
    %232 = vmatpush1.msra.mxu0 0.0
    %233 = vmatprep.subr.mxu0 0.0
    %234 = vmatpush1.msra.mxu0 0.0
    %235 = vmatprep.subr.mxu0 0.0
    %236 = vmatpush1.msra.mxu0 0.0
    %237 = vmatprep.subr.mxu0 0.0
    %238 = vmatpush1.msra.mxu0 0.0
    %239 = vmatprep.subr.mxu0 0.0
    %240 = vmatpush1.msra.mxu0 0.0
    %241 = vmatprep.subr.mxu0 0.0
    %242 = vmatpush1.msra.mxu0 0.0
    %243 = vmatprep.subr.mxu0 0.0
    %244 = vmatpush1.msra.mxu0 0.0
    %245 = vmatprep.subr.mxu0 0.0
    %246 = vmatpush1.msra.mxu0 0.0
    %247 = vmatprep.subr.mxu0 0.0
    %248 = vmatpush1.msra.mxu0 0.0
    %249 = vmatprep.subr.mxu0 0.0
    %250 = vmatpush1.msra.mxu0 0.0
    %251 = vmatprep.subr.mxu0 0.0
    %252 = vmatpush1.msra.mxu0 0.0
    %253 = vmatprep.subr.mxu0 0.0
    %254 = vmatpush1.msra.mxu0 0.0
    %255 = vmatprep.mubr.f32.mxu0 0.0
    %256 = vmatmul.mubr.f32.gmra.mrb[0].mxu0 %v180
    %v257 = vpop.f32.mrb[0].mxu0
    %v258 = vadd.f32 %v176, %v257
    %v259 = vpop.f32.mrb[0].mxu0
    %260 = vmatprep.mubr.f32.mxu0 0.0
    %261 = vmatmul.mubr.f32.gmra.mrb[0].mxu0 %v183
    %v262 = vpop.f32.mrb[0].mxu0
    %v263 = vadd.f32 %v176, %v262
    %v264 = vpop.f32.mrb[0].mxu0
    %265 = vmatprep.mubr.f32.mxu0 0.0
    %266 = vmatmul.mubr.f32.gmra.mrb[0].mxu0 %v186
    %v267 = vpop.f32.mrb[0].mxu0
    %v268 = vadd.f32 %v176, %v267
    %v269 = vpop.f32.mrb[0].mxu0
    %270 = vmatprep.mubr.f32.mxu0 0.0
    %271 = vmatmul.mubr.f32.gmra.mrb[0].mxu0 %v189
    %v272 = vpop.f32.mrb[0].mxu0
    %v273 = vadd.f32 %v176, %v272
    %v274 = vpop.f32.mrb[0].mxu0
    %275 = vdwg.mxu0
    %v276 = vadd.f32 %v258, %v46
    %v277 = vadd.f32 %v263, %v47
    %v278 = vadd.f32 %v268, %v48
    %v279 = vadd.f32 %v273, %v49
    %vm280 = vcmask 7168
    %v281 = vsel %vm280, %v276, -inf
    %v282 = vsel %vm280, %v277, -inf
    %v283 = vmax.f32 %v281, %v282
    %v284 = vrot.slane %v283, 4
    %v285 = vmax.f32 %v283, %v284
    %v286 = vrot.slane %v285, 2
    %v287 = vmax.f32 %v285, %v286
    %v288 = vrot.slane %v287, 1
    %v289 = vmax.f32 %v287, %v288
    %v290 = vsub.f32 %v276, %v289
    %v291 = vsub.f32 %v277, %v289
    %v292 = vmul.f32 %v290, 1.442695
    %v293 = vpow.pop %v292
    %v294 = vmul.f32 %v291, 1.442695
    %v295 = vpow.pop %v294
    %v296 = vsel %vm280, %v293, 0.0
    %v297 = vsel %vm280, %v295, 0.0
    %v298 = vadd.f32 %v296, %v297
    %v299 = vrot.slane %v298, 4
    %v300 = vadd.f32 %v298, %v299
    %v301 = vrot.slane %v300, 2
    %v302 = vadd.f32 %v300, %v301
    %v303 = vrot.slane %v302, 1
    %v304 = vadd.f32 %v302, %v303
    %v305 = vrcp.pop %v304
    %v306 = vmul.f32 %v293, %v305
    %v307 = vmul.f32 %v295, %v305
    %309 = vset.pattern.permute.xlu0 0
    %310 = vperm.xlu0 %309, %v306
    %v311 = vpop.permute.xlu0 %310
    %314 = vset.pattern.permute.xlu0 0
    %315 = vperm.xlu0 %314, %v307
    %v316 = vpop.permute.xlu0 %315
    %v318 = vmul.f32 %v311, %v38
    %v319 = vmul.f32 %v316, %v39
    %v320 = vsel %vm61, %v318, 0.0
    %v321 = vsel %vm61, %v319, 0.0
    %v322 = vadd.f32 %v320, %v321
    %v323 = vrot.slane %v322, 4
    %v324 = vadd.f32 %v322, %v323
    %v325 = vrot.slane %v324, 2
    %v326 = vadd.f32 %v324, %v325
    %v327 = vrot.slane %v326, 1
    %v328 = vadd.f32 %v326, %v327
    %v329 = vsel %vm280, %v278, -inf
    %v330 = vsel %vm280, %v279, -inf
    %v331 = vmax.f32 %v329, %v330
    %v332 = vrot.slane %v331, 4
    %v333 = vmax.f32 %v331, %v332
    %v334 = vrot.slane %v333, 2
    %v335 = vmax.f32 %v333, %v334
    %v336 = vrot.slane %v335, 1
    %v337 = vmax.f32 %v335, %v336
    %v338 = vsub.f32 %v278, %v337
    %v339 = vsub.f32 %v279, %v337
    %v340 = vmul.f32 %v338, 1.442695
    %v341 = vpow.pop %v340
    %v342 = vmul.f32 %v339, 1.442695
    %v343 = vpow.pop %v342
    %v344 = vsel %vm280, %v341, 0.0
    %v345 = vsel %vm280, %v343, 0.0
    %v346 = vadd.f32 %v344, %v345
    %v347 = vrot.slane %v346, 4
    %v348 = vadd.f32 %v346, %v347
    %v349 = vrot.slane %v348, 2
    %v350 = vadd.f32 %v348, %v349
    %v351 = vrot.slane %v350, 1
    %v352 = vadd.f32 %v350, %v351
    %v353 = vrcp.pop %v352
    %v354 = vmul.f32 %v341, %v353
    %v355 = vmul.f32 %v343, %v353
    %357 = vset.pattern.permute.xlu0 0
    %358 = vperm.xlu0 %357, %v354
    %v359 = vpop.permute.xlu0 %358
    %362 = vset.pattern.permute.xlu0 0
    %363 = vperm.xlu0 %362, %v355
    %v364 = vpop.permute.xlu0 %363
    %v366 = vmul.f32 %v359, %v40
    %v367 = vmul.f32 %v364, %v41
    %v368 = vsel %vm61, %v366, 0.0
    %v369 = vsel %vm61, %v367, 0.0
    %v370 = vadd.f32 %v368, %v369
    %v371 = vrot.slane %v370, 4
    %v372 = vadd.f32 %v370, %v371
    %v373 = vrot.slane %v372, 2
    %v374 = vadd.f32 %v372, %v373
    %v375 = vrot.slane %v374, 1
    %v376 = vadd.f32 %v374, %v375
    %vm377 = vcmask 1040384
    %v378 = vsel %vm377, %v328, %v376
    %v379 = vld [vmem:[%s6] sm:$0xff]
    %v380 = vld [vmem:[%s6 + $0x8] sm:$0xff]
    %v381 = vld [vmem:[%s6 + $0x10] sm:$0xff]
    %v382 = vld [vmem:[%s6 + $0x18] sm:$0xff]
    %v383 = vld [vmem:[%s7] sm:$0x1]
    %v385 = vlaneseq
    %v386 = vshrl.u32 %v385, 7
    %v387 = vsub.s32 0, %v386
    %v388 = vrot.slane %v383, %v387
    %v391 = vsel %vm61, %v378, 0
    %393 = vmatprep.subr.mxu0 0.0
    %394 = vmatpush1.msra.mxu0 %v379
    %395 = vmatprep.subr.mxu0 0.0
    %396 = vmatpush1.msra.mxu0 %v380
    %397 = vmatprep.subr.mxu0 0.0
    %398 = vmatpush1.msra.mxu0 %v381
    %399 = vmatprep.subr.mxu0 0.0
    %400 = vmatpush1.msra.mxu0 %v382
    %401 = vmatprep.subr.mxu0 0.0
    %402 = vmatpush1.msra.mxu0 0.0
    %403 = vmatprep.subr.mxu0 0.0
    %404 = vmatpush1.msra.mxu0 0.0
    %405 = vmatprep.subr.mxu0 0.0
    %406 = vmatpush1.msra.mxu0 0.0
    %407 = vmatprep.subr.mxu0 0.0
    %408 = vmatpush1.msra.mxu0 0.0
    %409 = vmatprep.subr.mxu0 0.0
    %410 = vmatpush1.msra.mxu0 0.0
    %411 = vmatprep.subr.mxu0 0.0
    %412 = vmatpush1.msra.mxu0 0.0
    %413 = vmatprep.subr.mxu0 0.0
    %414 = vmatpush1.msra.mxu0 0.0
    %415 = vmatprep.subr.mxu0 0.0
    %416 = vmatpush1.msra.mxu0 0.0
    %417 = vmatprep.subr.mxu0 0.0
    %418 = vmatpush1.msra.mxu0 0.0
    %419 = vmatprep.subr.mxu0 0.0
    %420 = vmatpush1.msra.mxu0 0.0
    %421 = vmatprep.subr.mxu0 0.0
    %422 = vmatpush1.msra.mxu0 0.0
    %423 = vmatprep.subr.mxu0 0.0
    %424 = vmatpush1.msra.mxu0 0.0
    %425 = vmatprep.subr.mxu0 0.0
    %426 = vmatpush1.msra.mxu0 0.0
    %427 = vmatprep.subr.mxu0 0.0
    %428 = vmatpush1.msra.mxu0 0.0
    %429 = vmatprep.subr.mxu0 0.0
    %430 = vmatpush1.msra.mxu0 0.0
    %431 = vmatprep.subr.mxu0 0.0
    %432 = vmatpush1.msra.mxu0 0.0
    %433 = vmatprep.subr.mxu0 0.0
    %434 = vmatpush1.msra.mxu0 0.0
    %435 = vmatprep.subr.mxu0 0.0
    %436 = vmatpush1.msra.mxu0 0.0
    %437 = vmatprep.subr.mxu0 0.0
    %438 = vmatpush1.msra.mxu0 0.0
    %439 = vmatprep.subr.mxu0 0.0
    %440 = vmatpush1.msra.mxu0 0.0
    %441 = vmatprep.subr.mxu0 0.0
    %442 = vmatpush1.msra.mxu0 0.0
    %443 = vmatprep.subr.mxu0 0.0
    %444 = vmatpush1.msra.mxu0 0.0
    %445 = vmatprep.subr.mxu0 0.0
    %446 = vmatpush1.msra.mxu0 0.0
    %447 = vmatprep.subr.mxu0 0.0
    %448 = vmatpush1.msra.mxu0 0.0
    %449 = vmatprep.subr.mxu0 0.0
    %450 = vmatpush1.msra.mxu0 0.0
    %451 = vmatprep.subr.mxu0 0.0
    %452 = vmatpush1.msra.mxu0 0.0
    %453 = vmatprep.subr.mxu0 0.0
    %454 = vmatpush1.msra.mxu0 0.0
    %455 = vmatprep.subr.mxu0 0.0
    %456 = vmatpush1.msra.mxu0 0.0
    %457 = vmatprep.mubr.f32.mxu0 0.0
    %458 = vmatmul.mubr.f32.gmra.mrb[0].mxu0 %v391
    %v459 = vpop.f32.mrb[0].mxu0
    %v460 = vadd.f32 %v388, %v459
    %v461 = vpop.f32.mrb[0].mxu0
    %462 = vdwg.mxu0
    %vm463 = vcmask 517120
    %v464 = vsel %vm463, %v460, 0.0
    %465 = vadd.xlane.f32.xlu0 %v464
    %v466 = vpop.xlane.xlu0 %465
    %v467 = vrcp.pop 64.0
    %v468 = vmul.f32 %v466, %v467
    %v469 = vsub.f32 %v460, %v468
    %v470 = vmul.f32 %v469, %v469
    %v471 = vsel %vm463, %v470, 0.0
    %472 = vadd.xlane.f32.xlu0 %v471
    %v473 = vpop.xlane.xlu0 %472
    %v474 = vmul.f32 %v473, 0.015873017
    %v475 = vrsqrt.pop %v474
    %v476 = vmul.f32 %v474, %v475
    %vm477 = vcmp.eq.f32.partialorder %v474, inf
    %v478 = vsel %vm477, %v474, %v476
    %vm479 = vcmp.eq.f32.partialorder %v474, 0.0
    %v480 = vand.u32 %v474, 2147483648
    %v481 = vsel %vm479, %v480, %v478
    %v482 = vadd.f32 %v481, 1e-06
    %v483 = vrcp.pop %v482
    %v484 = vld [vmem:[%s8] sm:$0x1]
    %v486 = vlaneseq
    %v487 = vshrl.u32 %v486, 7
    %v488 = vsub.s32 0, %v487
    %v489 = vrot.slane %v484, %v488
    %v491 = vmul.f32 %v489, %v469
    %v492 = vmul.f32 %v491, %v483
    %v493 = vld [vmem:[%s9] sm:$0x1]
    %v495 = vlaneseq
    %v496 = vshrl.u32 %v495, 7
    %v497 = vsub.s32 0, %v496
    %v498 = vrot.slane %v493, %v497
    %v500 = vadd.f32 %v492, %v498
    %501 = vst.msk [vmem:[#allocation3] sm:$0x3] %vm463, %v500
    // Predicated region
    $region42: #{tpu_custom_call.1} parent=1 // pred_check
      _
    $region43: #{tpu_custom_call.1} parent=1 // pred_check_branch
      %503 = sbr.rel (0) target = $region45
    $region44: #{tpu_custom_call.1} parent=1 // pred_region
      %s505 = ssub.s32 32, 32
      %506 = vsyncadd [#allocation4], %s505
      %s508 = sshll.u32 [#allocation3], 4
      %s509 = int_to_ptr.vmem [resolvable:$true] %s508
      %511 = dma.vmem_to_hbm [thread:$0]  %s509, 32, %s10, [#allocation4]
    $region45: #{tpu_custom_call.1} parent=1 // pred_fallthru
      _
    // Predicated region
    $region46: #{tpu_custom_call.1} parent=1 // pred_check
      _
    $region47: #{tpu_custom_call.1} parent=1 // pred_check_branch
      %513 = sbr.rel (0) target = $region49
    $region48: #{tpu_custom_call.1} parent=1 // pred_region
      %514 = dma.done [#allocation4], 32
    $region49: #{tpu_custom_call.1} parent=1 // pred_fallthru
      _
    %515 = vsyncpa [#allocation4], 1

</llo_original>
